<compile_context>
chip_gen: v6e
topology: v6e:2x2x1
jax: 0.10.0
libtpu: 0.0.40
codegen_flags: <defaults>
</compile_context>

<pallas_src>
import functools
import math

import jax
import jax.numpy as jnp
from jax.experimental import pallas as pl
from jax.experimental.pallas import tpu as pltpu


_SUBLANE = 8
_LANE = 128
# Safe scoped-VMEM budget: double-buffered working sets below stay < ~10 MiB, well inside
# v7x's 64 MiB physical VMEM as well as v5e/v6e's 128 MiB.
_VMEM_LIMIT = 32 * 1024 * 1024


def _pick_tile(dim, target, multiples):
    """Largest divisor of `dim` that is <= target and a multiple of one of `multiples`
    (tried in order, so 256-multiples are preferred for the 2x256x256 MXU on v6e/v7x),
    else the full dim (full-dim blocks are always layout-legal)."""
    if dim <= target:
        return dim
    for m in multiples:
        t = (target // m) * m
        while t >= m:
            if dim % t == 0:
                return t
            t -= m
    return dim


# ----------------------------- tiled linear (bf16 MXU, f32 acc) -----------------------------

def _linear_kernel(x_ref, w_ref, b_ref, o_ref, acc_ref, *, activation):
    @pl.when(pl.program_id(2) == 0)
    def _():
        acc_ref[...] = jnp.zeros_like(acc_ref)

    acc_ref[...] += jnp.dot(x_ref[...], w_ref[...], preferred_element_type=jnp.float32)

    @pl.when(pl.program_id(2) == pl.num_programs(2) - 1)
    def _():
        y = acc_ref[...] + b_ref[...]
        if activation == "tanh":
            y = jnp.tanh(y)
        elif activation == "gelu":
            # TODO(synk): HF BERT uses exact erf-GELU; tanh approximation used here.
            y = jax.nn.gelu(y, approximate=True)
        o_ref[...] = y.astype(o_ref.dtype)


def linear(x, w, b, activation="none", out_dtype=jnp.bfloat16):
    # x and w are expected to already be bf16 (activation master copy / pre-cast weights):
    # no wrapper-side .astype HBM passes.
    M, K = x.shape
    N = w.shape[1]
    tm = _pick_tile(M, 512, (_SUBLANE,))
    tn = _pick_tile(N, 1024, (256, _LANE))
    tk = _pick_tile(K, 768, (256, _LANE))
    return pl.pallas_call(
        functools.partial(_linear_kernel, activation=activation),
        out_shape=jax.ShapeDtypeStruct((M, N), out_dtype),
        grid=(M // tm, N // tn, K // tk),
        in_specs=[
            pl.BlockSpec((tm, tk), lambda i, j, k: (i, k)),
            pl.BlockSpec((tk, tn), lambda i, j, k: (k, j)),
            pl.BlockSpec((1, tn), lambda i, j, k: (0, j)),
        ],
        out_specs=pl.BlockSpec((tm, tn), lambda i, j, k: (i, j)),
        scratch_shapes=[pltpu.VMEM((tm, tn), jnp.float32)],
        compiler_params=pltpu.CompilerParams(
            dimension_semantics=("parallel", "parallel", "arbitrary"),
            vmem_limit_bytes=_VMEM_LIMIT),
    )(x, w, b.reshape(1, N))


# ------------------- tiled linear with fused residual-add + LayerNorm epilogue -------------------

def _linear_res_ln_kernel(x_ref, w_ref, b_ref, r_ref, g_ref, beta_ref, o_ref, acc_ref, *, eps):
    @pl.when(pl.program_id(1) == 0)
    def _():
        acc_ref[...] = jnp.zeros_like(acc_ref)

    acc_ref[...] += jnp.dot(x_ref[...], w_ref[...], preferred_element_type=jnp.float32)

    @pl.when(pl.program_id(1) == pl.num_programs(1) - 1)
    def _():
        y = acc_ref[...] + b_ref[...] + r_ref[...].astype(jnp.float32)
        mean = jnp.mean(y, axis=-1, keepdims=True)
        var = jnp.mean(jnp.square(y - mean), axis=-1, keepdims=True)
        o_ref[...] = ((y - mean) * jax.lax.rsqrt(var + eps)
                      * g_ref[...] + beta_ref[...]).astype(o_ref.dtype)


def linear_res_ln(x, w, b, residual, g, beta, eps=1e-12, out_dtype=jnp.bfloat16):
    # LayerNorm needs the full output row -> tile M and K only (full N per block).
    M, K = x.shape
    N = w.shape[1]
    tm = _pick_tile(M, 512, (_SUBLANE,))
    tk = _pick_tile(K, 768, (256, _LANE))
    return pl.pallas_call(
        functools.partial(_linear_res_ln_kernel, eps=eps),
        out_shape=jax.ShapeDtypeStruct((M, N), out_dtype),
        grid=(M // tm, K // tk),
        in_specs=[
            pl.BlockSpec((tm, tk), lambda i, k: (i, k)),
            pl.BlockSpec((tk, N), lambda i, k: (k, 0)),
            pl.BlockSpec((1, N), lambda i, k: (0, 0)),
            pl.BlockSpec((tm, N), lambda i, k: (i, 0)),
            pl.BlockSpec((1, N), lambda i, k: (0, 0)),
            pl.BlockSpec((1, N), lambda i, k: (0, 0)),
        ],
        out_specs=pl.BlockSpec((tm, N), lambda i, k: (i, 0)),
        scratch_shapes=[pltpu.VMEM((tm, N), jnp.float32)],
        compiler_params=pltpu.CompilerParams(
            dimension_semantics=("parallel", "arbitrary"),
            vmem_limit_bytes=_VMEM_LIMIT),
    )(x, w, b.reshape(1, N), residual, g.reshape(1, N), beta.reshape(1, N))


# ------------------------------- standalone LayerNorm (embeddings) -------------------------------

def _layernorm_kernel(x_ref, g_ref, b_ref, o_ref, *, eps):
    x = x_ref[...]
    mean = jnp.mean(x, axis=-1, keepdims=True)
    var = jnp.mean(jnp.square(x - mean), axis=-1, keepdims=True)
    o_ref[...] = ((x - mean) * jax.lax.rsqrt(var + eps) * g_ref[...]
                  + b_ref[...]).astype(o_ref.dtype)


def layernorm(x, g, b, eps=1e-12, out_dtype=jnp.bfloat16):
    # TODO(synk): could be fused as a prologue of the first layer's QKV matmul to save one
    # HBM pass; it already writes bf16 so the downstream slab is half-width.
    M, H = x.shape
    tm = _pick_tile(M, 512, (_SUBLANE,))
    return pl.pallas_call(
        functools.partial(_layernorm_kernel, eps=eps),
        out_shape=jax.ShapeDtypeStruct((M, H), out_dtype),
        grid=(M // tm,),
        in_specs=[pl.BlockSpec((tm, H), lambda i: (i, 0)),
                  pl.BlockSpec((1, H), lambda i: (0, 0)),
                  pl.BlockSpec((1, H), lambda i: (0, 0))],
        out_specs=pl.BlockSpec((tm, H), lambda i: (i, 0)),
        compiler_params=pltpu.CompilerParams(dimension_semantics=("parallel",)),
    )(x, g.reshape(1, H), b.reshape(1, H))


# ----------------------------------- multi-head self-attention -----------------------------------

def _attention_kernel(qkv_ref, o_ref, *, heads, hidden, scale):
    # qkv block: (1, S, 3H) bf16.  1/sqrt(dh) is folded into q (saves S*S-S*dh VPU muls per
    # head); per-head contexts are lane-concatenated and written with ONE dense (S, H) store.
    # TODO(synk): for BERT-base (dh=64) process heads in pairs so q/k/v slices land on
    # 128-lane boundaries; at these shapes every slice fits in a single vreg.
    qkv = qkv_ref[0]
    dh = hidden // heads
    scale_b = jnp.asarray(scale, dtype=qkv.dtype)
    ctx_parts = []
    for h in range(heads):
        q = qkv[:, h * dh:(h + 1) * dh] * scale_b
        k = qkv[:, hidden + h * dh: hidden + (h + 1) * dh]
        v = qkv[:, 2 * hidden + h * dh: 2 * hidden + (h + 1) * dh]
        # contract last dims directly ('qd,kd->qk') -> no materialized k.T
        s = jax.lax.dot_general(q, k, (((1,), (1,)), ((), ())),
                                preferred_element_type=jnp.float32)
        s = s - jnp.max(s, axis=-1, keepdims=True)
        p = jnp.exp(s)
        p = p * pl.reciprocal(jnp.sum(p, axis=-1, keepdims=True), approx=False)
        ctx_parts.append(jnp.dot(p.astype(v.dtype), v, preferred_element_type=jnp.float32))
    o_ref[0] = jnp.concatenate(ctx_parts, axis=-1).astype(o_ref.dtype)


def attention(qkv, *, heads, hidden):
    # TODO(synk): no attention mask (original module calls bert(x) with default all-ones mask).
    # TODO(synk): for v7x add a q-tile / head-pair grid axis so both TensorCores get work
    # when B is small.
    B, S, H3 = qkv.shape
    dh = hidden // heads
    return pl.pallas_call(
        functools.partial(_attention_kernel, heads=heads, hidden=hidden,
                          scale=1.0 / math.sqrt(dh)),
        out_shape=jax.ShapeDtypeStruct((B, S, hidden), jnp.bfloat16),
        grid=(B,),
        in_specs=[pl.BlockSpec((1, S, H3), lambda b: (b, 0, 0))],
        out_specs=pl.BlockSpec((1, S, hidden), lambda b: (b, 0, 0)),
        compiler_params=pltpu.CompilerParams(
            dimension_semantics=("parallel",),
            vmem_limit_bytes=_VMEM_LIMIT),
    )(qkv)


# -------------------------------------- bidirectional LSTM ---------------------------------------

def _lstm_kernel(gx_ref, whh_ref, o_ref, hblk, c_scr, *, hidden, T):
    # Both directions merged into one program (single-TC chips would serialize a grid=(2,)).
    # Hidden state kept block-diagonally as (2, 2H) bf16: row0=[h_fwd | 0], row1=[0 | h_bwd],
    # so one (2,2H)@(2H,4H) bf16 MXU dot per step computes both directions' recurrent gates.
    H = hidden
    whh = whh_ref[...]                          # (2H, 4H) bf16, loaded once
    hblk[...] = jnp.zeros_like(hblk)            # (2, 2H) bf16
    c_scr[...] = jnp.zeros_like(c_scr)          # (2, H)  f32

    row = jax.lax.broadcasted_iota(jnp.float32, (2, 1), 0)   # [[0],[1]]
    m_fwd = 1.0 - row
    m_bwd = row

    def step(t, carry):
        rev = T - 1 - t
        # gather the two precomputed x@W_ih+b rows: fwd at t, bwd at T-1-t.
        gx_f = gx_ref[pl.ds(t, 1), pl.ds(0, 4 * H)]           # (1, 4H) bf16
        gx_b = gx_ref[pl.ds(rev, 1), pl.ds(4 * H, 4 * H)]     # (1, 4H) bf16
        gx = jnp.concatenate([gx_f, gx_b], axis=0).astype(jnp.float32)
        gates = gx + jnp.dot(hblk[...], whh, preferred_element_type=jnp.float32)  # (2, 4H)
        i_g = jax.nn.sigmoid(gates[:, 0 * H:1 * H])
        f_g = jax.nn.sigmoid(gates[:, 1 * H:2 * H])
        g_g = jnp.tanh(gates[:, 2 * H:3 * H])
        o_g = jax.nn.sigmoid(gates[:, 3 * H:4 * H])
        c = f_g * c_scr[...] + i_g * g_g
        h_new = o_g * jnp.tanh(c)                              # (2, H) f32
        c_scr[...] = c
        # rebuild block-diagonal bf16 hidden state for the next step's single dot.
        hblk[...] = jnp.concatenate([h_new * m_fwd, h_new * m_bwd],
                                    axis=-1).astype(hblk.dtype)
        h_bf = h_new.astype(o_ref.dtype)
        o_ref[pl.ds(t, 1), pl.ds(0, H)] = h_bf[0:1]
        o_ref[pl.ds(rev, 1), pl.ds(H, H)] = h_bf[1:2]
        return carry

    # Unrolled so the LLO scheduler can overlap step t's EUP/VPU gate math with step t+1's
    # gx load and MXU push (T = batch size here, small).
    jax.lax.fori_loop(0, T, step, 0, unroll=True)


def bilstm_layer(x, layer):
    # x: (T, In) bf16.  Input projection hoisted out of the recurrence: fwd|bwd fused into a
    # single (In, 8H) matmul (no jnp.stack / extra HBM copies).
    T = x.shape[0]
    H = layer["whh"].shape[0] // 2
    gx = linear(x, layer["w_ih"], layer["b"])                 # (T, 8H) bf16
    return pl.pallas_call(
        functools.partial(_lstm_kernel, hidden=H, T=T),
        out_shape=jax.ShapeDtypeStruct((T, 2 * H), jnp.bfloat16),
        grid=(1,),
        in_specs=[pl.BlockSpec((T, 8 * H), lambda i: (0, 0)),
                  pl.BlockSpec((2 * H, 4 * H), lambda i: (0, 0))],
        out_specs=pl.BlockSpec((T, 2 * H), lambda i: (0, 0)),
        scratch_shapes=[pltpu.VMEM((2, 2 * H), jnp.bfloat16),
                        pltpu.VMEM((2, H), jnp.float32)],
        compiler_params=pltpu.CompilerParams(
            dimension_semantics=("arbitrary",),
            vmem_limit_bytes=_VMEM_LIMIT),
    )(gx, layer["whh"])                                        # (T, 2H) bf16


# ------------------------------------------ model glue -------------------------------------------

def bert_pooler(input_ids, p, *, heads):
    B, S = input_ids.shape
    H = p["word_emb"].shape[1]
    # TODO(synk): embedding row-gather stays in XLA (no clean small Pallas gather); the sum is
    # f32 and the LayerNorm kernel immediately re-emits the bf16 activation master copy.
    emb = (p["word_emb"][input_ids]
           + p["pos_emb"][:S][None, :, :]
           + p["type_emb"][0][None, None, :])                   # token_type_ids == 0
    h = layernorm(emb.reshape(B * S, H), p["emb_ln_g"], p["emb_ln_b"])   # (B*S, H) bf16

    for lp in p["layers"]:
        # fused QKV projection: one (B*S,H)x(H,3H) bf16 matmul feeding attention directly.
        qkv = linear(h, lp["w_qkv"], lp["b_qkv"])                         # (B*S, 3H) bf16
        ctx = attention(qkv.reshape(B, S, 3 * H), heads=heads, hidden=H)  # (B, S, H) bf16
        h = linear_res_ln(ctx.reshape(B * S, H), lp["wo"], lp["bo"],
                          h, lp["ln1_g"], lp["ln1_b"])                    # bf16
        inter = linear(h, lp["wi"], lp["bi"], activation="gelu")          # bf16
        h = linear_res_ln(inter, lp["wf"], lp["bf"], h, lp["ln2_g"], lp["ln2_b"])

    cls = h.reshape(B, S, H)[:, 0, :]                                     # (B, H) bf16
    return linear(cls, p["pool_w"], p["pool_b"], activation="tanh")       # (B, H) bf16


def bert_bilstm_forward(input_ids, params, *, heads):
    pooled = bert_pooler(input_ids, params["bert"], heads=heads)          # (B, H) bf16
    # nn.LSTM receives a 2-D tensor -> treated as an unbatched sequence of length B.
    seq = pooled
    for layer in params["lstm"]:
        seq = bilstm_layer(seq, layer)                                    # (B, 2*lstm_hidden)
    return linear(seq, params["fc_w"], params["fc_b"],
                  out_dtype=jnp.float32)                                  # (B, num_class)


# ------------------------------------------ param init -------------------------------------------

def init_params(key, *, vocab, max_pos, hidden, inter, n_layers,
                lstm_hidden, lstm_layers, num_class):
    keys = iter(jax.random.split(key, 512))

    def nrm(shape, scale=0.02, dtype=jnp.float32):
        return (scale * jax.random.normal(next(keys), shape, dtype=jnp.float32)).astype(dtype)

    bf = jnp.bfloat16  # matmul weights pre-cast ONCE here (no per-call wrapper casts)

    bert = {
        "word_emb": nrm((vocab, hidden)),
        "pos_emb": nrm((max_pos, hidden)),
        "type_emb": nrm((2, hidden)),
        "emb_ln_g": jnp.ones((hidden,), jnp.float32),
        "emb_ln_b": jnp.zeros((hidden,), jnp.float32),
        "layers": [],
        "pool_w": nrm((hidden, hidden), dtype=bf),
        "pool_b": jnp.zeros((hidden,), jnp.float32),
    }
    for _ in range(n_layers):
        bert["layers"].append({
            # fused QKV weight: columns [0:H)=Q, [H:2H)=K, [2H:3H)=V
            "w_qkv": nrm((hidden, 3 * hidden), dtype=bf),
            "b_qkv": jnp.zeros((3 * hidden,), jnp.float32),
            "wo": nrm((hidden, hidden), dtype=bf), "bo": jnp.zeros((hidden,), jnp.float32),
            "ln1_g": jnp.ones((hidden,), jnp.float32),
            "ln1_b": jnp.zeros((hidden,), jnp.float32),
            "wi": nrm((hidden, inter), dtype=bf), "bi": jnp.zeros((inter,), jnp.float32),
            "wf": nrm((inter, hidden), dtype=bf), "bf": jnp.zeros((hidden,), jnp.float32),
            "ln2_g": jnp.ones((hidden,), jnp.float32),
            "ln2_b": jnp.zeros((hidden,), jnp.float32),
        })

    # LSTM weights stored pre-fused:
    #   w_ih: (In, 8H)  columns [0:4H)=fwd W_ih^T, [4H:8H)=bwd W_ih^T   (PyTorch W_ih is (4H,In))
    #   b:    (8H,)     per-direction b_ih + b_hh summed, fwd|bwd concatenated
    #   whh:  (2H, 4H)  rows [0:H)=fwd W_hh^T, [H:2H)=bwd W_hh^T  (block-diag recurrence dot)
    lstm = []
    in_size = hidden
    for _ in range(lstm_layers):
        lstm.append({
            "w_ih": nrm((in_size, 8 * lstm_hidden), scale=0.1, dtype=bf),
            "b": nrm((8 * lstm_hidden,), scale=0.1),
            "whh": nrm((2 * lstm_hidden, 4 * lstm_hidden), scale=0.1, dtype=bf),
        })
        in_size = 2 * lstm_hidden

    return {
        "bert": bert,
        "lstm": lstm,
        "fc_w": nrm((2 * lstm_hidden, num_class), scale=0.1, dtype=bf),
        "fc_b": jnp.zeros((num_class,), jnp.float32),
    }


# --------------------------------------------- main ----------------------------------------------

if __name__ == "__main__":
    # Small, module-consistent config: hidden=32 (stand-in for 768),
    # lstm_hidden = hidden // 2 = 16, num_class = 2.
    B, S = 2, 8
    VOCAB, MAX_POS = 64, 16
    HIDDEN, HEADS, INTER, N_LAYERS = 32, 2, 64, 2
    LSTM_HIDDEN, LSTM_LAYERS, NUM_CLASS = HIDDEN // 2, 2, 2

    root = jax.random.PRNGKey(0)
    k_ids, k_params = jax.random.split(root)

    params = init_params(
        k_params, vocab=VOCAB, max_pos=MAX_POS, hidden=HIDDEN, inter=INTER,
        n_layers=N_LAYERS, lstm_hidden=LSTM_HIDDEN, lstm_layers=LSTM_LAYERS,
        num_class=NUM_CLASS,
    )
    input_ids = jax.random.randint(k_ids, (B, S), 0, VOCAB, dtype=jnp.int32)

    out = bert_bilstm_forward(input_ids, params, heads=HEADS)
    out = jax.block_until_ready(out)
    assert out.shape == (B, NUM_CLASS), out.shape
    print("KERNEL_OK")
</pallas_src>

<mosaic_0001>
module attributes {stable_mosaic.version = 11 : i64} {
  func.func @_layernorm_kernel(%arg0: i32, %arg1: memref<16x32xf32, #tpu.memory_space<vmem>>, %arg2: memref<1x32xf32, #tpu.memory_space<vmem>>, %arg3: memref<1x32xf32, #tpu.memory_space<vmem>>, %arg4: memref<16x32xbf16, #tpu.memory_space<vmem>>) attributes {dimension_semantics = [#tpu.dimension_semantics<parallel>], iteration_bounds = array<i64: 1>, scalar_prefetch = 0 : i64, scratch_operands = 0 : i64, tpu.core_type = #tpu.core_type<tc>, window_params = [{transform_indices = @transform_0, window_bounds = array<i64: 16, 32>}, {pipeline_mode = #tpu.pipeline_mode<synchronous>, transform_indices = @transform_1, window_bounds = array<i64: 1, 32>}, {pipeline_mode = #tpu.pipeline_mode<synchronous>, transform_indices = @transform_2, window_bounds = array<i64: 1, 32>}, {transform_indices = @transform_3, window_bounds = array<i64: 16, 32>}]} {
    %c0 = arith.constant 0 : index
    %c0_0 = arith.constant 0 : index
    %0 = vector.load %arg1[%c0, %c0_0] : memref<16x32xf32, #tpu.memory_space<vmem>>, vector<16x32xf32>
    %cst = arith.constant dense<0.000000e+00> : vector<16xf32>
    %1 = vector.multi_reduction <add>, %0, %cst [1] : vector<16x32xf32> to vector<16xf32>
    %2 = vector.shape_cast %1 : vector<16xf32> to vector<16x1xf32>
    %cst_1 = arith.constant 3.200000e+01 : f32
    %3 = vector.broadcast %cst_1 : f32 to vector<16x1xf32>
    %4 = arith.divf %2, %3 : vector<16x1xf32>
    %5 = vector.broadcast %4 : vector<16x1xf32> to vector<16x32xf32>
    %6 = arith.subf %0, %5 : vector<16x32xf32>
    %7 = arith.mulf %6, %6 : vector<16x32xf32>
    %cst_2 = arith.constant dense<0.000000e+00> : vector<16xf32>
    %8 = vector.multi_reduction <add>, %7, %cst_2 [1] : vector<16x32xf32> to vector<16xf32>
    %9 = vector.shape_cast %8 : vector<16xf32> to vector<16x1xf32>
    %cst_3 = arith.constant 3.200000e+01 : f32
    %10 = vector.broadcast %cst_3 : f32 to vector<16x1xf32>
    %11 = arith.divf %9, %10 : vector<16x1xf32>
    %12 = vector.broadcast %4 : vector<16x1xf32> to vector<16x32xf32>
    %13 = arith.subf %0, %12 : vector<16x32xf32>
    %cst_4 = arith.constant 9.99999996E-13 : f32
    %14 = vector.broadcast %cst_4 : f32 to vector<16x1xf32>
    %15 = arith.addf %11, %14 : vector<16x1xf32>
    %16 = math.rsqrt %15 : vector<16x1xf32>
    %17 = vector.broadcast %16 : vector<16x1xf32> to vector<16x32xf32>
    %18 = arith.mulf %13, %17 : vector<16x32xf32>
    %c0_5 = arith.constant 0 : index
    %c0_6 = arith.constant 0 : index
    %19 = vector.load %arg2[%c0_5, %c0_6] : memref<1x32xf32, #tpu.memory_space<vmem>>, vector<1x32xf32>
    %20 = vector.broadcast %19 : vector<1x32xf32> to vector<16x32xf32>
    %21 = arith.mulf %18, %20 : vector<16x32xf32>
    %c0_7 = arith.constant 0 : index
    %c0_8 = arith.constant 0 : index
    %22 = vector.load %arg3[%c0_7, %c0_8] : memref<1x32xf32, #tpu.memory_space<vmem>>, vector<1x32xf32>
    %23 = vector.broadcast %22 : vector<1x32xf32> to vector<16x32xf32>
    %24 = arith.addf %21, %23 : vector<16x32xf32>
    %25 = arith.truncf %24 : vector<16x32xf32> to vector<16x32xbf16>
    %c0_9 = arith.constant 0 : index
    %c0_10 = arith.constant 0 : index
    %26 = vector.load %arg4[%c0_9, %c0_10] : memref<16x32xbf16, #tpu.memory_space<vmem>>, vector<16x32xbf16>
    tpu.vector_store %arg4[%c0_9, %c0_10], %25 {strides = array<i32>} : memref<16x32xbf16, #tpu.memory_space<vmem>>, vector<16x32xbf16>,
    return
  }
  func.func @transform_0(%arg0: i32) -> (i32, i32) {
    %c0_i32 = arith.constant 0 : i32
    %c0_i32_0 = arith.constant 0 : i32
    return %arg0, %c0_i32 : i32, i32
  }
  func.func @transform_1(%arg0: i32) -> (i32, i32) {
    %c0_i32 = arith.constant 0 : i32
    %c0_i32_0 = arith.constant 0 : i32
    %c0_i32_1 = arith.constant 0 : i32
    return %c0_i32, %c0_i32_0 : i32, i32
  }
  func.func @transform_2(%arg0: i32) -> (i32, i32) {
    %c0_i32 = arith.constant 0 : i32
    %c0_i32_0 = arith.constant 0 : i32
    %c0_i32_1 = arith.constant 0 : i32
    return %c0_i32, %c0_i32_0 : i32, i32
  }
  func.func @transform_3(%arg0: i32) -> (i32, i32) {
    %c0_i32 = arith.constant 0 : i32
    %c0_i32_0 = arith.constant 0 : i32
    return %arg0, %c0_i32 : i32, i32
  }
}

</mosaic_0001>

<llo_original>
// kernel: tpu_custom_call.1
$region0: #{tpu_custom_call.1}
  #allocation0 [shape = 'u32[]', space=smem, size = 0x4, offset = 0x4, fixed_abs, tag = 'smem constant byte address 0x4 - core index']
  #allocation1 [shape = 'u32[144,128]{1,0:T(1,128)}', space=vmem, size = 0x12000, scoped, tag = 'internal scratch']
  %s0 = inlined_call_operand.hbm [shape: f32[16,32], index: 0, kind: input, shape index: {}]
  %s1 = inlined_call_operand.vmem [shape: f32[1,32], index: 1, kind: input, shape index: {}]
  %s2 = inlined_call_operand.vmem [shape: f32[1,32], index: 2, kind: input, shape index: {}]
  %s3 = inlined_call_operand.hbm [shape: bf16[16,32], index: 3, kind: output, shape index: {}]
  %s4 = sld [smem:[#allocation0]]
  $region26: #{tpu_custom_call.1} parent=0
    _
  %s6 = ssub.s32 1, %s4
  %s7 = scalar_select 0, %s6, %s4
  $region1: #{tpu_custom_call.1} parent=0
    #allocation2 [shape = 'u8[8192]{0}', space=vmem, size = 0x2000, scoped, tag = 'input window, operand 0, single buffered']
    #allocation3 [shape = 's32[1]{0}', space=sflag, size = 0x4, scoped, tag = 'scoped memory for tpu_custom_call.1']
    #allocation4 [shape = 's32[1]{0}', space=sflag, size = 0x4, scoped, tag = 'scoped memory for tpu_custom_call.1']
    #allocation5 [shape = 'u8[4096]{0}', space=vmem, size = 0x1000, scoped, tag = 'output window, operand 0, single buffered']
    %8 = vsyncpa [#allocation3], 0
    %9 = vsyncpa [#allocation4], 0
    // Predicated region
    $region2: #{tpu_custom_call.1} parent=1 // pred_check
      _
    $region3: #{tpu_custom_call.1} parent=1 // pred_check_branch
      %11 = sbr.rel (0) target = $region5
    $region4: #{tpu_custom_call.1} parent=1 // pred_region
      %s13 = ssub.s32 256, 256
      %14 = vsyncadd [#allocation3], %s13
      %s15 = sshll.u32 [#allocation2], 4
      %s16 = int_to_ptr.vmem [resolvable:$true] %s15
      %21 = dma.hbm_to_vmem [thread:$0]  %s0, 256, %s16, [#allocation3], 128, 128, 8
    $region5: #{tpu_custom_call.1} parent=1 // pred_fallthru
      _
    // Predicated region
    $region6: #{tpu_custom_call.1} parent=1 // pred_check
      _
    $region7: #{tpu_custom_call.1} parent=1 // pred_check_branch
      %23 = sbr.rel (0) target = $region9
    $region8: #{tpu_custom_call.1} parent=1 // pred_region
      _
    $region9: #{tpu_custom_call.1} parent=1 // pred_fallthru
      _
    // Predicated region
    $region10: #{tpu_custom_call.1} parent=1 // pred_check
      _
    $region11: #{tpu_custom_call.1} parent=1 // pred_check_branch
      %25 = sbr.rel (0) target = $region13
    $region12: #{tpu_custom_call.1} parent=1 // pred_region
      _
    $region13: #{tpu_custom_call.1} parent=1 // pred_fallthru
      _
    // Predicated region
    $region14: #{tpu_custom_call.1} parent=1 // pred_check
      _
    $region15: #{tpu_custom_call.1} parent=1 // pred_check_branch
      %27 = sbr.rel (0) target = $region17
    $region16: #{tpu_custom_call.1} parent=1 // pred_region
      %28 = dma.done [#allocation3], 256
    $region17: #{tpu_custom_call.1} parent=1 // pred_fallthru
      _
    %v29 = vld [vmem:[#allocation2] sm:$0xff]
    %v30 = vld [vmem:[#allocation2 + $0x8] sm:$0xff]
    %vm31 = vcmask 261120
    %v32 = vsel %vm31, %v29, 0.0
    %33 = vadd.xlane.f32.xlu0 %v32
    %v34 = vpop.xlane.xlu0 %33
    %v35 = vsel %vm31, %v30, 0.0
    %36 = vadd.xlane.f32.xlu0 %v35
    %v37 = vpop.xlane.xlu0 %36
    %v38 = vrcp.pop 32.0
    %v39 = vmul.f32 %v34, %v38
    %v40 = vmul.f32 %v37, %v38
    %v41 = vsub.f32 %v29, %v39
    %v42 = vsub.f32 %v30, %v40
    %v43 = vmul.f32 %v41, %v41
    %v44 = vmul.f32 %v42, %v42
    %v45 = vsel %vm31, %v43, 0.0
    %46 = vadd.xlane.f32.xlu0 %v45
    %v47 = vpop.xlane.xlu0 %46
    %v48 = vsel %vm31, %v44, 0.0
    %49 = vadd.xlane.f32.xlu0 %v48
    %v50 = vpop.xlane.xlu0 %49
    %v51 = vmul.f32 %v47, %v38
    %v52 = vmul.f32 %v50, %v38
    %v53 = vadd.f32 %v51, 1e-12
    %v54 = vadd.f32 %v52, 1e-12
    %v55 = vrsqrt.pop %v53
    %v56 = vrsqrt.pop %v54
    %v57 = vmul.f32 %v41, %v55
    %v58 = vmul.f32 %v42, %v56
    %v59 = vld [vmem:[%s1] sm:$0x1]
    %v61 = vlaneseq
    %v62 = vshrl.u32 %v61, 7
    %v63 = vsub.s32 0, %v62
    %v64 = vrot.slane %v59, %v63
    %v66 = vmul.f32 %v57, %v64
    %v67 = vmul.f32 %v58, %v64
    %v68 = vld [vmem:[%s2] sm:$0x1]
    %v70 = vlaneseq
    %v71 = vshrl.u32 %v70, 7
    %v72 = vsub.s32 0, %v71
    %v73 = vrot.slane %v68, %v72
    %v75 = vadd.f32 %v66, %v73
    %v76 = vadd.f32 %v67, %v73
    %v77 = vpack.c.bf16 %v76, %v75
    %v79 = vunpack.c.l.b16 %v77
    %v80 = vunpack.c.h.b16 %v77
    %v81 = vpack.c.b16 %v79, %v79
    %v82 = vpack.c.b16 %v80, %v80
    %vm85 = vcmask 257024
    %86 = vst.msk [vmem:[#allocation5] sm:$0xf] %vm85, %v81
    %87 = vst.msk [vmem:[#allocation5 + $0x4] sm:$0xf] %vm85, %v82
    // Predicated region
    $region18: #{tpu_custom_call.1} parent=1 // pred_check
      _
    $region19: #{tpu_custom_call.1} parent=1 // pred_check_branch
      %89 = sbr.rel (0) target = $region21
    $region20: #{tpu_custom_call.1} parent=1 // pred_region
      %s91 = ssub.s32 128, 128
      %92 = vsyncadd [#allocation4], %s91
      %s93 = sshll.u32 [#allocation5], 4
      %s94 = int_to_ptr.vmem [resolvable:$true] %s93
      %99 = dma.vmem_to_hbm [thread:$0]  %s94, 128, %s3, [#allocation4], 64, 64, 4
    $region21: #{tpu_custom_call.1} parent=1 // pred_fallthru
      _
    // Predicated region
    $region22: #{tpu_custom_call.1} parent=1 // pred_check
      _
    $region23: #{tpu_custom_call.1} parent=1 // pred_check_branch
      %101 = sbr.rel (0) target = $region25
    $region24: #{tpu_custom_call.1} parent=1 // pred_region
      %102 = dma.done [#allocation4], 128
    $region25: #{tpu_custom_call.1} parent=1 // pred_fallthru
      _
    %103 = vsyncpa [#allocation3], 1
    %104 = vsyncpa [#allocation4], 1

</llo_original>
